<compile_context>
chip_gen: v5e
topology: v5e:2x2
jax: 0.10.0
libtpu: 0.0.40
codegen_flags: <defaults>
</compile_context>

<pallas_src>
import functools

import jax
import jax.numpy as jnp
from jax import lax
from jax.experimental import pallas as pl
from jax.experimental.pallas import tpu as pltpu


def _cat_loss_kernel(nc, c, label_num, margin,
                     x_ref, loss_ref, correct_ref,
                     g_acc, sqr_acc, sqc_acc, gc_acc):
    # x_ref:   (b, tile_d) feature tile (original dtype), b = nc * c
    # g_acc:   (b, b)  f32 Gram accumulator (reused as the distance matrix in finalize)
    # sqr_acc: (b, 1)  f32 per-sample squared norms (row-oriented)
    # sqc_acc: (8, b)  f32 per-sample squared norms (lane-oriented; row 0 used)
    # gc_acc:  (nc,nc) f32 class-center Gram accumulator
    b = nc * c
    k = pl.program_id(0)

    @pl.when(k == 0)
    def _init():
        g_acc[...] = jnp.zeros_like(g_acc)
        sqr_acc[...] = jnp.zeros_like(sqr_acc)
        sqc_acc[...] = jnp.zeros_like(sqc_acc)
        gc_acc[...] = jnp.zeros_like(gc_acc)

    x = x_ref[...]                                   # (b, tile_d), feats dtype
    xf = x.astype(jnp.float32)
    xsq = xf * xf                                    # f32 squares; VPU work hidden under MXU

    # ---- flat batch Gram: G += x @ x^T (f32 MXU accumulation) ----
    # NOTE(v5e): if the bundle dump shows XLU saturation from an implicit per-tile
    # transpose of the contracting-dim-1 RHS, stream a pre-transposed copy instead.
    g_acc[...] += lax.dot_general(
        x, x, (((1,), (1,)), ((), ())),
        preferred_element_type=jnp.float32)

    # ---- per-sample squared norms, both orientations, f32, per tile ----
    sqr_acc[...] += jnp.sum(xsq, axis=1, keepdims=True)            # (b, 1)
    ones8 = jnp.ones((8, x.shape[1]), jnp.float32)
    sqc_acc[...] += lax.dot_general(                               # (8, b)
        ones8, xsq, (((1,), (1,)), ((), ())),
        preferred_element_type=jnp.float32)

    # ---- class-center Gram, accumulated per tile ----
    # cent_t = S @ x_t (chunk row-sums of this feature tile); gc += cent_t @ cent_t^T
    a_i = lax.broadcasted_iota(jnp.int32, (nc, b), 0)
    j_i = lax.broadcasted_iota(jnp.int32, (nc, b), 1)
    S = ((j_i >= a_i * c) & (j_i < (a_i + 1) * c)).astype(x.dtype)  # (nc, b)
    cent = jnp.dot(S, x, preferred_element_type=jnp.float32)        # (nc, tile_d) f32
    gc_acc[...] += lax.dot_general(
        cent, cent, (((1,), (1,)), ((), ())),
        preferred_element_type=jnp.float32)

    @pl.when(k == pl.num_programs(0) - 1)
    def _finalize():
        big = jnp.float32(1e30)

        # full-batch pairwise distances, written IN PLACE over the Gram scratch
        sq_r = sqr_acc[...]                       # (b, 1) f32
        sq_c = sqc_acc[0:1, :]                    # (1, b) f32
        g_acc[...] = jnp.sqrt(jnp.maximum(sq_r + sq_c - 2.0 * g_acc[...],
                                          jnp.float32(1e-12)))
        dist = g_acc[...]                         # block diagonal == per-chunk pdist

        # chunk-membership mask from in-kernel chunk ids (no int div, no extra inputs)
        idx_r = lax.broadcasted_iota(jnp.int32, (b, 1), 0)
        idx_c = lax.broadcasted_iota(jnp.int32, (1, b), 1)
        cid_r = jnp.zeros((b, 1), jnp.int32)
        cid_c = jnp.zeros((1, b), jnp.int32)
        for a in range(1, nc):                    # nc-1 single-vreg compares
            cid_r = cid_r + (idx_r >= a * c).astype(jnp.int32)
            cid_c = cid_c + (idx_c >= a * c).astype(jnp.int32)
        same_chunk = cid_r == cid_c               # only boolean (b,b) live value

        # intra term: per-column within-chunk max (torch dim=0), exp, masked sum.
        # `masked` is computed once and reused; off-chunk entries are -1e30 so
        # exp(-1e30 - max_v) underflows to exactly 0 in f32 (keep the sentinel f32).
        masked = jnp.where(same_chunk, dist, -big)
        max_v = jnp.max(masked, axis=0, keepdims=True)             # (1, b)
        e = jnp.exp(masked - max_v)
        intra_mean = jnp.sum(e) * jnp.float32(1.0 / (nc * c * c))

        # class-center distances from the accumulated center Gram (tiny: nc x nc)
        gc = gc_acc[...] * jnp.float32(1.0 / (c * c))
        r_c = lax.broadcasted_iota(jnp.int32, (nc, nc), 0)
        c_c = lax.broadcasted_iota(jnp.int32, (nc, nc), 1)
        gc_diag = jnp.where(r_c == c_c, gc, 0.0)
        sqc_row = jnp.sum(gc_diag, axis=1, keepdims=True)          # (nc, 1)
        sqc_col = jnp.sum(gc_diag, axis=0, keepdims=True)          # (1, nc)
        dmat = jnp.sqrt(jnp.maximum(sqc_row + sqc_col - 2.0 * gc,
                                    jnp.float32(1e-12)))

        # class mask: targets = cat([uni, uni, uni]) -> same class iff
        # (i - j) in {0, +/-L, +/-2L}  (avoids in-kernel int div/mod)
        diff = r_c - c_c
        L = label_num
        class_mask = ((diff == 0) | (diff == L) | (diff == -L) |
                      (diff == 2 * L) | (diff == -2 * L))

        dist_ap = jnp.max(jnp.where(class_mask, dmat, -big), axis=1, keepdims=True)
        dist_an = jnp.min(jnp.where(class_mask, big, dmat), axis=1, keepdims=True)

        hinge = jnp.maximum(dist_ap - dist_an + jnp.float32(margin), 0.0)
        rank_loss = jnp.sum(hinge) * jnp.float32(1.0 / nc)

        loss_ref[0, 0] = rank_loss + jnp.float32(0.1) * intra_mean
        correct_ref[0, 0] = jnp.sum((dist_an >= dist_ap).astype(jnp.int32))


def center_aligned_triplet_loss4(feats, labels, margin=0.3, gram_in_bf16=False):
    """feats: (batch, feat_dim), labels: (batch,) int. Returns (loss, correct).

    NOTE: like the PyTorch module, the batch must be laid out as 3*num_classes
    consecutive equal-size chunks ordered [uni, uni, uni]; only the *count* of
    unique labels is used (jnp.unique runs eagerly -> do not jit over `labels`).
    """
    label_uni = jnp.unique(labels)            # eager -> static class count
    label_num = int(label_uni.shape[0])
    nc = 3 * label_num                        # number of chunks / centers
    b, d = feats.shape
    assert b % nc == 0, "batch must split evenly into 3 * num_classes chunks"
    c = b // nc

    x = feats
    if gram_in_bf16 and x.dtype == jnp.float32:
        # Perf option (esp. v6e): halves streamed HBM bytes, bf16 MXU path.
        # Norm / center / finalize math stays f32; ~1e-3 relative error in the loss.
        x = x.astype(jnp.bfloat16)
    itemsize = jnp.dtype(x.dtype).itemsize

    # ---- generation-aware VMEM budget (v7x: 64 MiB physical, v5e/v6e: 128 MiB) ----
    try:
        vmem_cap = int(pltpu.get_tpu_info().vmem_capacity_bytes)
    except Exception:
        vmem_cap = 64 << 20                   # conservative fallback (works on v7x)
    vmem_limit = int(min(vmem_cap * 0.85, 100 << 20))
    vmem_limit = max(vmem_limit, 32 << 20)

    # Fixed VMEM, independent of tile_d: Gram scratch + ~3-4 live (b,b) finalize
    # temporaries (dist reuses g_acc) + small norm / center-Gram scratch + slack.
    fixed = (b * b * 4                        # g_acc
             + 5 * b * b * 4                  # finalize temps / compiler slack
             + b * 128 * 4                    # sqr_acc (lane padded)
             + 8 * b * 4                      # sqc_acc
             + 128 * 128 * 4                  # gc_acc (padded) + misc
             + (1 << 20))
    d128 = ((d + 127) // 128) * 128
    avail_x = vmem_limit - fixed              # budget for the double-buffered x tile
    max_tile = (avail_x // (2 * b * itemsize)) // 128 * 128 if avail_x > 0 else 0

    if max_tile >= d128:
        tile_d, nk, d_pad = d, 1, d           # whole feature dim in one tile, no pad
    else:
        # NOTE: for b large enough that even tile_d=128 doesn't fit, the fully
        # VMEM-resident (b,b) design hits its documented scaling cliff.
        tile_d = max(128, int(max_tile))
        if tile_d >= 1024:                    # round big tiles for nicer DMA shapes
            tile_d = tile_d // 512 * 512
        nk = -(-d // tile_d)
        d_pad = nk * tile_d
    if d_pad != d:
        x = jnp.pad(x, ((0, 0), (0, d_pad - d)))   # zero pad: no effect on the loss

    # TODO(synk): on v7x, split the D-reduction across the two TensorCores
    # (per-core partial Gram + core_barrier reduce); the single "arbitrary"
    # reduction axis below pins the kernel to one core.
    loss, correct = pl.pallas_call(
        functools.partial(_cat_loss_kernel, nc, c, label_num, float(margin)),
        out_shape=(
            jax.ShapeDtypeStruct((1, 1), jnp.float32),
            jax.ShapeDtypeStruct((1, 1), jnp.int32),
        ),
        grid_spec=pltpu.PrefetchScalarGridSpec(
            num_scalar_prefetch=0,
            grid=(nk,),
            in_specs=[pl.BlockSpec((b, tile_d), lambda k: (0, k))],
            out_specs=(
                pl.BlockSpec((1, 1), lambda k: (0, 0), memory_space=pltpu.SMEM),
                pl.BlockSpec((1, 1), lambda k: (0, 0), memory_space=pltpu.SMEM),
            ),
            scratch_shapes=[
                pltpu.VMEM((b, b), jnp.float32),     # Gram -> distance matrix
                pltpu.VMEM((b, 1), jnp.float32),     # row-oriented sq norms
                pltpu.VMEM((8, b), jnp.float32),     # lane-oriented sq norms
                pltpu.VMEM((nc, nc), jnp.float32),   # class-center Gram
            ],
        ),
        compiler_params=pltpu.CompilerParams(
            dimension_semantics=("arbitrary",),
            vmem_limit_bytes=vmem_limit,
        ),
    )(x)
    return loss[0, 0], correct[0, 0]


# ---------------- pure-JAX reference (mirrors the PyTorch forward) ----------------
def _reference(feats, labels, margin):
    feats = feats.astype(jnp.float32)
    label_uni = jnp.unique(labels)
    label_num = int(label_uni.shape[0])
    n = 3 * label_num
    b, d = feats.shape
    c = b // n
    targets = jnp.concatenate([label_uni, label_uni, label_uni])

    centers, intra = [], []
    for i in range(n):
        fi = feats[i * c:(i + 1) * c]
        g = fi @ fi.T
        sq = jnp.sum(fi * fi, axis=1)
        di = jnp.sqrt(jnp.maximum(sq[:, None] + sq[None, :] - 2.0 * g, 1e-12))
        mv = jnp.max(di, axis=0, keepdims=True)
        intra.append(jnp.mean(jnp.exp(di - mv)))
        centers.append(jnp.mean(fi, axis=0))
    centers = jnp.stack(centers)
    intra = jnp.stack(intra)

    g2 = centers @ centers.T
    sq2 = jnp.sum(centers * centers, axis=1)
    dmat = jnp.sqrt(jnp.maximum(sq2[:, None] + sq2[None, :] - 2.0 * g2, 1e-12))
    mask = targets[:, None] == targets[None, :]
    dist_ap = jnp.max(jnp.where(mask, dmat, -jnp.inf), axis=1)
    dist_an = jnp.min(jnp.where(mask, jnp.inf, dmat), axis=1)
    loss = jnp.mean(jnp.maximum(dist_ap - dist_an + margin, 0.0)) + 0.1 * jnp.mean(intra)
    correct = jnp.sum(dist_an >= dist_ap)
    return loss, correct


if __name__ == "__main__":
    key = jax.random.PRNGKey(0)
    label_num = 2      # unique classes
    per_chunk = 4      # samples per (class, modality) chunk
    feat_dim = 32
    batch = 3 * label_num * per_chunk   # 24

    feats = jax.random.normal(key, (batch, feat_dim), dtype=jnp.float32)
    # only uniqueness / count of classes matters; layout is fixed by the module
    labels = jnp.tile(
        jnp.repeat(jnp.arange(label_num, dtype=jnp.int32), per_chunk), 3)   # (24,)

    loss, correct = center_aligned_triplet_loss4(feats, labels, margin=0.3)
    jax.block_until_ready((loss, correct))

    ref_loss, ref_correct = _reference(feats, labels, 0.3)
    assert abs(float(loss) - float(ref_loss)) < 1e-4, (float(loss), float(ref_loss))
    assert int(correct) == int(ref_correct), (int(correct), int(ref_correct))

    # exercise the bf16-streamed variant (perf path); loose sanity check only
    loss_bf16, correct_bf16 = center_aligned_triplet_loss4(
        feats, labels, margin=0.3, gram_in_bf16=True)
    jax.block_until_ready((loss_bf16, correct_bf16))
    assert bool(jnp.isfinite(loss_bf16)), float(loss_bf16)

    print("KERNEL_OK")
</pallas_src>

<mosaic_0001>
module attributes {stable_mosaic.version = 11 : i64} {
  func.func @_cat_loss_kernel(%arg0: i32, %arg1: memref<24x32xf32, #tpu.memory_space<vmem>>, %arg2: memref<1x1xf32, #tpu.memory_space<smem>>, %arg3: memref<1x1xi32, #tpu.memory_space<smem>>, %arg4: memref<24x24xf32, #tpu.memory_space<vmem>>, %arg5: memref<24x1xf32, #tpu.memory_space<vmem>>, %arg6: memref<8x24xf32, #tpu.memory_space<vmem>>, %arg7: memref<6x6xf32, #tpu.memory_space<vmem>>) attributes {dimension_semantics = [#tpu.dimension_semantics<arbitrary>], iteration_bounds = array<i64: 1>, scalar_prefetch = 0 : i64, scratch_operands = 4 : i64, tpu.core_type = #tpu.core_type<tc>, window_params = [{transform_indices = @transform_0, window_bounds = array<i64: 24, 32>}, {transform_indices = @transform_1, window_bounds = array<i64: 1, 1>}, {transform_indices = @transform_2, window_bounds = array<i64: 1, 1>}]} {
    %c0_i32 = arith.constant 0 : i32
    %0 = arith.cmpi eq, %arg0, %c0_i32 : i32
    %1 = arith.extui %0 : i1 to i32
    %c0_i32_0 = arith.constant 0 : i32
    %2 = arith.cmpi ne, %1, %c0_i32_0 : i32
    scf.if %2 {
      %cst_26 = arith.constant 0.000000e+00 : f32
      %40 = vector.broadcast %cst_26 : f32 to vector<24x24xf32>
      %c0_27 = arith.constant 0 : index
      %c0_28 = arith.constant 0 : index
      %41 = vector.load %arg4[%c0_27, %c0_28] : memref<24x24xf32, #tpu.memory_space<vmem>>, vector<24x24xf32>
      tpu.vector_store %arg4[%c0_27, %c0_28], %40 {strides = array<i32>} : memref<24x24xf32, #tpu.memory_space<vmem>>, vector<24x24xf32>,
      %cst_29 = arith.constant 0.000000e+00 : f32
      %42 = vector.broadcast %cst_29 : f32 to vector<24x1xf32>
      %c0_30 = arith.constant 0 : index
      %c0_31 = arith.constant 0 : index
      %43 = vector.load %arg5[%c0_30, %c0_31] : memref<24x1xf32, #tpu.memory_space<vmem>>, vector<24x1xf32>
      tpu.vector_store %arg5[%c0_30, %c0_31], %42 {strides = array<i32>} : memref<24x1xf32, #tpu.memory_space<vmem>>, vector<24x1xf32>,
      %cst_32 = arith.constant 0.000000e+00 : f32
      %44 = vector.broadcast %cst_32 : f32 to vector<8x24xf32>
      %c0_33 = arith.constant 0 : index
      %c0_34 = arith.constant 0 : index
      %45 = vector.load %arg6[%c0_33, %c0_34] : memref<8x24xf32, #tpu.memory_space<vmem>>, vector<8x24xf32>
      tpu.vector_store %arg6[%c0_33, %c0_34], %44 {strides = array<i32>} : memref<8x24xf32, #tpu.memory_space<vmem>>, vector<8x24xf32>,
      %cst_35 = arith.constant 0.000000e+00 : f32
      %46 = vector.broadcast %cst_35 : f32 to vector<6x6xf32>
      %c0_36 = arith.constant 0 : index
      %c0_37 = arith.constant 0 : index
      %47 = vector.load %arg7[%c0_36, %c0_37] : memref<6x6xf32, #tpu.memory_space<vmem>>, vector<6x6xf32>
      tpu.vector_store %arg7[%c0_36, %c0_37], %46 {strides = array<i32>} : memref<6x6xf32, #tpu.memory_space<vmem>>, vector<6x6xf32>,
    } else {
    }
    %c0 = arith.constant 0 : index
    %c0_1 = arith.constant 0 : index
    %3 = vector.load %arg1[%c0, %c0_1] : memref<24x32xf32, #tpu.memory_space<vmem>>, vector<24x32xf32>
    %4 = arith.mulf %3, %3 : vector<24x32xf32>
    %c0_2 = arith.constant 0 : index
    %c0_3 = arith.constant 0 : index
    %5 = vector.load %arg4[%c0_2, %c0_3] : memref<24x24xf32, #tpu.memory_space<vmem>>, vector<24x24xf32>
    %cst = arith.constant dense<0.000000e+00> : vector<24x24xf32>
    %6 = tpu.matmul %3, %3, %cst {dimension_numbers = #tpu.dot_dimension_numbers<[1], [1], [0], [0], [0, 0, 1, 0], [], []>} : vector<24x32xf32>, vector<24x32xf32>, vector<24x24xf32> -> vector<24x24xf32>
    %7 = arith.addf %5, %6 : vector<24x24xf32>
    %c0_4 = arith.constant 0 : index
    %c0_5 = arith.constant 0 : index
    %8 = vector.load %arg4[%c0_4, %c0_5] : memref<24x24xf32, #tpu.memory_space<vmem>>, vector<24x24xf32>
    tpu.vector_store %arg4[%c0_4, %c0_5], %7 {strides = array<i32>} : memref<24x24xf32, #tpu.memory_space<vmem>>, vector<24x24xf32>,
    %c0_6 = arith.constant 0 : index
    %c0_7 = arith.constant 0 : index
    %9 = vector.load %arg5[%c0_6, %c0_7] : memref<24x1xf32, #tpu.memory_space<vmem>>, vector<24x1xf32>
    %cst_8 = arith.constant dense<0.000000e+00> : vector<24xf32>
    %10 = vector.multi_reduction <add>, %4, %cst_8 [1] : vector<24x32xf32> to vector<24xf32>
    %11 = vector.shape_cast %10 : vector<24xf32> to vector<24x1xf32>
    %12 = arith.addf %9, %11 : vector<24x1xf32>
    %c0_9 = arith.constant 0 : index
    %c0_10 = arith.constant 0 : index
    %13 = vector.load %arg5[%c0_9, %c0_10] : memref<24x1xf32, #tpu.memory_space<vmem>>, vector<24x1xf32>
    tpu.vector_store %arg5[%c0_9, %c0_10], %12 {strides = array<i32>} : memref<24x1xf32, #tpu.memory_space<vmem>>, vector<24x1xf32>,
    %cst_11 = arith.constant 1.000000e+00 : f32
    %14 = vector.broadcast %cst_11 : f32 to vector<8x32xf32>
    %c0_12 = arith.constant 0 : index
    %c0_13 = arith.constant 0 : index
    %15 = vector.load %arg6[%c0_12, %c0_13] : memref<8x24xf32, #tpu.memory_space<vmem>>, vector<8x24xf32>
    %cst_14 = arith.constant dense<0.000000e+00> : vector<8x24xf32>
    %16 = tpu.matmul %14, %4, %cst_14 {dimension_numbers = #tpu.dot_dimension_numbers<[1], [1], [0], [0], [0, 0, 1, 0], [], []>} : vector<8x32xf32>, vector<24x32xf32>, vector<8x24xf32> -> vector<8x24xf32>
    %17 = arith.addf %15, %16 : vector<8x24xf32>
    %c0_15 = arith.constant 0 : index
    %c0_16 = arith.constant 0 : index
    %18 = vector.load %arg6[%c0_15, %c0_16] : memref<8x24xf32, #tpu.memory_space<vmem>>, vector<8x24xf32>
    tpu.vector_store %arg6[%c0_15, %c0_16], %17 {strides = array<i32>} : memref<8x24xf32, #tpu.memory_space<vmem>>, vector<8x24xf32>,
    %19 = tpu.iota {dimensions = array<i32: 0>} : vector<6x24xi32>
    %20 = tpu.iota {dimensions = array<i32: 1>} : vector<6x24xi32>
    %c4_i32 = arith.constant 4 : i32
    %21 = vector.broadcast %c4_i32 : i32 to vector<6x24xi32>
    %22 = arith.muli %19, %21 : vector<6x24xi32>
    %23 = arith.cmpi sge, %20, %22 : vector<6x24xi32>
    %c1_i32 = arith.constant 1 : i32
    %24 = vector.broadcast %c1_i32 : i32 to vector<6x24xi32>
    %25 = arith.addi %19, %24 : vector<6x24xi32>
    %c4_i32_17 = arith.constant 4 : i32
    %26 = vector.broadcast %c4_i32_17 : i32 to vector<6x24xi32>
    %27 = arith.muli %25, %26 : vector<6x24xi32>
    %28 = arith.cmpi slt, %20, %27 : vector<6x24xi32>
    %29 = arith.andi %23, %28 : vector<6x24xi1>
    %30 = arith.extui %29 : vector<6x24xi1> to vector<6x24xi32>
    %31 = arith.sitofp %30 : vector<6x24xi32> to vector<6x24xf32>
    %cst_18 = arith.constant dense<0.000000e+00> : vector<6x32xf32>
    %32 = tpu.matmul %31, %3, %cst_18 {dimension_numbers = #tpu.dot_dimension_numbers<[1], [0], [0], [1], [0, 0, 1, 1], [], []>} : vector<6x24xf32>, vector<24x32xf32>, vector<6x32xf32> -> vector<6x32xf32>
    %c0_19 = arith.constant 0 : index
    %c0_20 = arith.constant 0 : index
    %33 = vector.load %arg7[%c0_19, %c0_20] : memref<6x6xf32, #tpu.memory_space<vmem>>, vector<6x6xf32>
    %cst_21 = arith.constant dense<0.000000e+00> : vector<6x6xf32>
    %34 = tpu.matmul %32, %32, %cst_21 {dimension_numbers = #tpu.dot_dimension_numbers<[1], [1], [0], [0], [0, 0, 1, 0], [], []>} : vector<6x32xf32>, vector<6x32xf32>, vector<6x6xf32> -> vector<6x6xf32>
    %35 = arith.addf %33, %34 : vector<6x6xf32>
    %c0_22 = arith.constant 0 : index
    %c0_23 = arith.constant 0 : index
    %36 = vector.load %arg7[%c0_22, %c0_23] : memref<6x6xf32, #tpu.memory_space<vmem>>, vector<6x6xf32>
    tpu.vector_store %arg7[%c0_22, %c0_23], %35 {strides = array<i32>} : memref<6x6xf32, #tpu.memory_space<vmem>>, vector<6x6xf32>,
    %c0_i32_24 = arith.constant 0 : i32
    %37 = arith.cmpi eq, %arg0, %c0_i32_24 : i32
    %38 = arith.extui %37 : i1 to i32
    %c0_i32_25 = arith.constant 0 : i32
    %39 = arith.cmpi ne, %38, %c0_i32_25 : i32
    scf.if %39 {
      %c0_26 = arith.constant 0 : index
      %c0_27 = arith.constant 0 : index
      %40 = vector.load %arg5[%c0_26, %c0_27] : memref<24x1xf32, #tpu.memory_space<vmem>>, vector<24x1xf32>
      %c0_28 = arith.constant 0 : index
      %c0_29 = arith.constant 0 : index
      %41 = vector.load %arg6[%c0_28, %c0_29] : memref<8x24xf32, #tpu.memory_space<vmem>>, vector<1x24xf32>
      %42 = vector.broadcast %40 : vector<24x1xf32> to vector<24x24xf32>
      %43 = vector.broadcast %41 : vector<1x24xf32> to vector<24x24xf32>
      %44 = arith.addf %42, %43 : vector<24x24xf32>
      %c0_30 = arith.constant 0 : index
      %c0_31 = arith.constant 0 : index
      %45 = vector.load %arg4[%c0_30, %c0_31] : memref<24x24xf32, #tpu.memory_space<vmem>>, vector<24x24xf32>
      %cst_32 = arith.constant 2.000000e+00 : f32
      %46 = vector.broadcast %cst_32 : f32 to vector<24x24xf32>
      %47 = arith.mulf %46, %45 : vector<24x24xf32>
      %48 = arith.subf %44, %47 : vector<24x24xf32>
      %cst_33 = arith.constant 9.99999996E-13 : f32
      %49 = vector.broadcast %cst_33 : f32 to vector<24x24xf32>
      %50 = arith.maximumf %48, %49 : vector<24x24xf32>
      %51 = math.sqrt %50 : vector<24x24xf32>
      %c0_34 = arith.constant 0 : index
      %c0_35 = arith.constant 0 : index
      %52 = vector.load %arg4[%c0_34, %c0_35] : memref<24x24xf32, #tpu.memory_space<vmem>>, vector<24x24xf32>
      tpu.vector_store %arg4[%c0_34, %c0_35], %51 {strides = array<i32>} : memref<24x24xf32, #tpu.memory_space<vmem>>, vector<24x24xf32>,
      %c0_36 = arith.constant 0 : index
      %c0_37 = arith.constant 0 : index
      %53 = vector.load %arg4[%c0_36, %c0_37] : memref<24x24xf32, #tpu.memory_space<vmem>>, vector<24x24xf32>
      %54 = tpu.iota {dimensions = array<i32: 0>} : vector<24x1xi32>
      %55 = tpu.iota {dimensions = array<i32: 1>} : vector<1x24xi32>
      %c0_i32_38 = arith.constant 0 : i32
      %56 = vector.broadcast %c0_i32_38 : i32 to vector<24x1xi32>
      %c0_i32_39 = arith.constant 0 : i32
      %57 = vector.broadcast %c0_i32_39 : i32 to vector<1x24xi32>
      %c4_i32_40 = arith.constant 4 : i32
      %58 = vector.broadcast %c4_i32_40 : i32 to vector<24x1xi32>
      %59 = arith.cmpi sge, %54, %58 : vector<24x1xi32>
      %60 = arith.extui %59 : vector<24x1xi1> to vector<24x1xi32>
      %61 = arith.addi %56, %60 : vector<24x1xi32>
      %c4_i32_41 = arith.constant 4 : i32
      %62 = vector.broadcast %c4_i32_41 : i32 to vector<1x24xi32>
      %63 = arith.cmpi sge, %55, %62 : vector<1x24xi32>
      %64 = arith.extui %63 : vector<1x24xi1> to vector<1x24xi32>
      %65 = arith.addi %57, %64 : vector<1x24xi32>
      %c8_i32 = arith.constant 8 : i32
      %66 = vector.broadcast %c8_i32 : i32 to vector<24x1xi32>
      %67 = arith.cmpi sge, %54, %66 : vector<24x1xi32>
      %68 = arith.extui %67 : vector<24x1xi1> to vector<24x1xi32>
      %69 = arith.addi %61, %68 : vector<24x1xi32>
      %c8_i32_42 = arith.constant 8 : i32
      %70 = vector.broadcast %c8_i32_42 : i32 to vector<1x24xi32>
      %71 = arith.cmpi sge, %55, %70 : vector<1x24xi32>
      %72 = arith.extui %71 : vector<1x24xi1> to vector<1x24xi32>
      %73 = arith.addi %65, %72 : vector<1x24xi32>
      %c12_i32 = arith.constant 12 : i32
      %74 = vector.broadcast %c12_i32 : i32 to vector<24x1xi32>
      %75 = arith.cmpi sge, %54, %74 : vector<24x1xi32>
      %76 = arith.extui %75 : vector<24x1xi1> to vector<24x1xi32>
      %77 = arith.addi %69, %76 : vector<24x1xi32>
      %c12_i32_43 = arith.constant 12 : i32
      %78 = vector.broadcast %c12_i32_43 : i32 to vector<1x24xi32>
      %79 = arith.cmpi sge, %55, %78 : vector<1x24xi32>
      %80 = arith.extui %79 : vector<1x24xi1> to vector<1x24xi32>
      %81 = arith.addi %73, %80 : vector<1x24xi32>
      %c16_i32 = arith.constant 16 : i32
      %82 = vector.broadcast %c16_i32 : i32 to vector<24x1xi32>
      %83 = arith.cmpi sge, %54, %82 : vector<24x1xi32>
      %84 = arith.extui %83 : vector<24x1xi1> to vector<24x1xi32>
      %85 = arith.addi %77, %84 : vector<24x1xi32>
      %c16_i32_44 = arith.constant 16 : i32
      %86 = vector.broadcast %c16_i32_44 : i32 to vector<1x24xi32>
      %87 = arith.cmpi sge, %55, %86 : vector<1x24xi32>
      %88 = arith.extui %87 : vector<1x24xi1> to vector<1x24xi32>
      %89 = arith.addi %81, %88 : vector<1x24xi32>
      %c20_i32 = arith.constant 20 : i32
      %90 = vector.broadcast %c20_i32 : i32 to vector<24x1xi32>
      %91 = arith.cmpi sge, %54, %90 : vector<24x1xi32>
      %92 = arith.extui %91 : vector<24x1xi1> to vector<24x1xi32>
      %93 = arith.addi %85, %92 : vector<24x1xi32>
      %c20_i32_45 = arith.constant 20 : i32
      %94 = vector.broadcast %c20_i32_45 : i32 to vector<1x24xi32>
      %95 = arith.cmpi sge, %55, %94 : vector<1x24xi32>
      %96 = arith.extui %95 : vector<1x24xi1> to vector<1x24xi32>
      %97 = arith.addi %89, %96 : vector<1x24xi32>
      %98 = vector.broadcast %93 : vector<24x1xi32> to vector<24x24xi32>
      %99 = vector.broadcast %97 : vector<1x24xi32> to vector<24x24xi32>
      %100 = arith.cmpi eq, %98, %99 : vector<24x24xi32>
      %cst_46 = arith.constant 0.000000e+00 : f32
      %cst_47 = arith.constant 1.000000e+30 : f32
      %101 = arith.subf %cst_46, %cst_47 : f32
      %102 = vector.broadcast %101 : f32 to vector<24x24xf32>
      %103 = arith.select %100, %53, %102 : vector<24x24xi1>, vector<24x24xf32>
      %cst_48 = arith.constant dense<0xFF800000> : vector<24xf32>
      %104 = vector.multi_reduction <maximumf>, %103, %cst_48 [0] : vector<24x24xf32> to vector<24xf32>
      %105 = vector.shape_cast %104 : vector<24xf32> to vector<1x24xf32>
      %106 = vector.broadcast %105 : vector<1x24xf32> to vector<24x24xf32>
      %107 = arith.subf %103, %106 : vector<24x24xf32>
      %108 = math.exp %107 : vector<24x24xf32>
      %109 = vector.shape_cast %108 : vector<24x24xf32> to vector<1x24x24xf32>
      %cst_49 = arith.constant dense<0.000000e+00> : vector<1xf32>
      %110 = vector.multi_reduction <add>, %109, %cst_49 [1, 2] : vector<1x24x24xf32> to vector<1xf32>
      %111 = vector.shape_cast %110 : vector<1xf32> to vector<1x1x1xf32>
      %112 = vector.extract %111[0, 0, 0] : f32 from vector<1x1x1xf32>
      %cst_50 = arith.constant 0.010416667 : f32
      %113 = arith.mulf %112, %cst_50 : f32
      %c0_51 = arith.constant 0 : index
      %c0_52 = arith.constant 0 : index
      %114 = vector.load %arg7[%c0_51, %c0_52] : memref<6x6xf32, #tpu.memory_space<vmem>>, vector<6x6xf32>
      %cst_53 = arith.constant 6.250000e-02 : f32
      %115 = vector.broadcast %cst_53 : f32 to vector<6x6xf32>
      %116 = arith.mulf %114, %115 : vector<6x6xf32>
      %117 = tpu.iota {dimensions = array<i32: 0>} : vector<6x6xi32>
      %118 = tpu.iota {dimensions = array<i32: 1>} : vector<6x6xi32>
      %119 = arith.cmpi eq, %117, %118 : vector<6x6xi32>
      %cst_54 = arith.constant 0.000000e+00 : f32
      %120 = vector.broadcast %cst_54 : f32 to vector<6x6xf32>
      %121 = arith.select %119, %116, %120 : vector<6x6xi1>, vector<6x6xf32>
      %cst_55 = arith.constant dense<0.000000e+00> : vector<6xf32>
      %122 = vector.multi_reduction <add>, %121, %cst_55 [1] : vector<6x6xf32> to vector<6xf32>
      %123 = vector.shape_cast %122 : vector<6xf32> to vector<6x1xf32>
      %cst_56 = arith.constant dense<0.000000e+00> : vector<6xf32>
      %124 = vector.multi_reduction <add>, %121, %cst_56 [0] : vector<6x6xf32> to vector<6xf32>
      %125 = vector.shape_cast %124 : vector<6xf32> to vector<1x6xf32>
      %126 = vector.broadcast %123 : vector<6x1xf32> to vector<6x6xf32>
      %127 = vector.broadcast %125 : vector<1x6xf32> to vector<6x6xf32>
      %128 = arith.addf %126, %127 : vector<6x6xf32>
      %cst_57 = arith.constant 2.000000e+00 : f32
      %129 = vector.broadcast %cst_57 : f32 to vector<6x6xf32>
      %130 = arith.mulf %129, %116 : vector<6x6xf32>
      %131 = arith.subf %128, %130 : vector<6x6xf32>
      %cst_58 = arith.constant 9.99999996E-13 : f32
      %132 = vector.broadcast %cst_58 : f32 to vector<6x6xf32>
      %133 = arith.maximumf %131, %132 : vector<6x6xf32>
      %134 = math.sqrt %133 : vector<6x6xf32>
      %135 = arith.subi %117, %118 : vector<6x6xi32>
      %c0_i32_59 = arith.constant 0 : i32
      %136 = vector.broadcast %c0_i32_59 : i32 to vector<6x6xi32>
      %137 = arith.cmpi eq, %135, %136 : vector<6x6xi32>
      %c2_i32 = arith.constant 2 : i32
      %138 = vector.broadcast %c2_i32 : i32 to vector<6x6xi32>
      %139 = arith.cmpi eq, %135, %138 : vector<6x6xi32>
      %140 = arith.ori %137, %139 : vector<6x6xi1>
      %c-2_i32 = arith.constant -2 : i32
      %141 = vector.broadcast %c-2_i32 : i32 to vector<6x6xi32>
      %142 = arith.cmpi eq, %135, %141 : vector<6x6xi32>
      %143 = arith.ori %140, %142 : vector<6x6xi1>
      %c4_i32_60 = arith.constant 4 : i32
      %144 = vector.broadcast %c4_i32_60 : i32 to vector<6x6xi32>
      %145 = arith.cmpi eq, %135, %144 : vector<6x6xi32>
      %146 = arith.ori %143, %145 : vector<6x6xi1>
      %c-4_i32 = arith.constant -4 : i32
      %147 = vector.broadcast %c-4_i32 : i32 to vector<6x6xi32>
      %148 = arith.cmpi eq, %135, %147 : vector<6x6xi32>
      %149 = arith.ori %146, %148 : vector<6x6xi1>
      %cst_61 = arith.constant 0.000000e+00 : f32
      %cst_62 = arith.constant 1.000000e+30 : f32
      %150 = arith.subf %cst_61, %cst_62 : f32
      %151 = vector.broadcast %150 : f32 to vector<6x6xf32>
      %152 = arith.select %149, %134, %151 : vector<6x6xi1>, vector<6x6xf32>
      %cst_63 = arith.constant dense<0xFF800000> : vector<6xf32>
      %153 = vector.multi_reduction <maximumf>, %152, %cst_63 [1] : vector<6x6xf32> to vector<6xf32>
      %154 = vector.shape_cast %153 : vector<6xf32> to vector<6x1xf32>
      %cst_64 = arith.constant 1.000000e+30 : f32
      %155 = vector.broadcast %cst_64 : f32 to vector<6x6xf32>
      %156 = arith.select %149, %155, %134 : vector<6x6xi1>, vector<6x6xf32>
      %cst_65 = arith.constant dense<0x7F800000> : vector<6xf32>
      %157 = vector.multi_reduction <minimumf>, %156, %cst_65 [1] : vector<6x6xf32> to vector<6xf32>
      %158 = vector.shape_cast %157 : vector<6xf32> to vector<6x1xf32>
      %159 = arith.subf %154, %158 : vector<6x1xf32>
      %cst_66 = arith.constant 3.000000e-01 : f32
      %160 = vector.broadcast %cst_66 : f32 to vector<6x1xf32>
      %161 = arith.addf %159, %160 : vector<6x1xf32>
      %cst_67 = arith.constant 0.000000e+00 : f32
      %162 = vector.broadcast %cst_67 : f32 to vector<6x1xf32>
      %163 = arith.maximumf %161, %162 : vector<6x1xf32>
      %164 = vector.shape_cast %163 : vector<6x1xf32> to vector<1x6x1xf32>
      %cst_68 = arith.constant dense<0.000000e+00> : vector<1xf32>
      %165 = vector.multi_reduction <add>, %164, %cst_68 [1, 2] : vector<1x6x1xf32> to vector<1xf32>
      %166 = vector.shape_cast %165 : vector<1xf32> to vector<1x1x1xf32>
      %167 = vector.extract %166[0, 0, 0] : f32 from vector<1x1x1xf32>
      %cst_69 = arith.constant 0.166666672 : f32
      %168 = arith.mulf %167, %cst_69 : f32
      %cst_70 = arith.constant 1.000000e-01 : f32
      %169 = arith.mulf %cst_70, %113 : f32
      %170 = arith.addf %168, %169 : f32
      %c0_71 = arith.constant 0 : index
      %c0_72 = arith.constant 0 : index
      %171 = memref.load %arg2[%c0_71, %c0_72] : memref<1x1xf32, #tpu.memory_space<smem>>
      memref.store %170, %arg2[%c0_71, %c0_72] : memref<1x1xf32, #tpu.memory_space<smem>>
      %172 = arith.cmpf oge, %158, %154 : vector<6x1xf32>
      %173 = arith.extui %172 : vector<6x1xi1> to vector<6x1xi32>
      %174 = vector.shape_cast %173 : vector<6x1xi32> to vector<1x6x1xi32>
      %cst_73 = arith.constant dense<0> : vector<1xi32>
      %175 = vector.multi_reduction <add>, %174, %cst_73 [1, 2] : vector<1x6x1xi32> to vector<1xi32>
      %176 = vector.shape_cast %175 : vector<1xi32> to vector<1x1x1xi32>
      %177 = vector.extract %176[0, 0, 0] : i32 from vector<1x1x1xi32>
      %c0_74 = arith.constant 0 : index
      %c0_75 = arith.constant 0 : index
      %178 = memref.load %arg3[%c0_74, %c0_75] : memref<1x1xi32, #tpu.memory_space<smem>>
      memref.store %177, %arg3[%c0_74, %c0_75] : memref<1x1xi32, #tpu.memory_space<smem>>
    } else {
    }
    return
  }
  func.func @transform_0(%arg0: i32) -> (i32, i32) {
    %c0_i32 = arith.constant 0 : i32
    %c0_i32_0 = arith.constant 0 : i32
    return %c0_i32, %arg0 : i32, i32
  }
  func.func @transform_1(%arg0: i32) -> (i32, i32) {
    %c0_i32 = arith.constant 0 : i32
    %c0_i32_0 = arith.constant 0 : i32
    %c0_i32_1 = arith.constant 0 : i32
    return %c0_i32, %c0_i32_0 : i32, i32
  }
  func.func @transform_2(%arg0: i32) -> (i32, i32) {
    %c0_i32 = arith.constant 0 : i32
    %c0_i32_0 = arith.constant 0 : i32
    %c0_i32_1 = arith.constant 0 : i32
    return %c0_i32, %c0_i32_0 : i32, i32
  }
}

</mosaic_0001>

<llo_original>
// kernel: tpu_custom_call.1
$region0: #{tpu_custom_call.1}
  #allocation0 [shape = 'u32[]', space=smem, size = 0x4, offset = 0x4, fixed_abs, tag = 'smem constant byte address 0x4 - core index']
  #allocation1 [shape = 'u32[72,128]{1,0:T(1,128)}', space=vmem, size = 0x9000, scoped, tag = 'internal scratch']
  #allocation2 [shape = 'f32[24,24]{1,0:T(8,128)}', space=vmem, size = 0x3000, scoped, tag = 'scratch operand']
  #allocation3 [shape = 'f32[24,1]{1,0:T(8,128)}', space=vmem, size = 0x3000, scoped, tag = 'scratch operand']
  #allocation4 [shape = 'f32[8,24]{1,0:T(8,128)}', space=vmem, size = 0x1000, scoped, tag = 'scratch operand']
  #allocation5 [shape = 'f32[6,6]{1,0:T(8,128)}', space=vmem, size = 0x1000, scoped, tag = 'scratch operand']
  %s0 = inlined_call_operand.hbm [shape: f32[24,32], index: 0, kind: input, shape index: {}]
  %s1 = inlined_call_operand.hbm [shape: f32[1,1], index: 1, kind: output, shape index: {0}]
  %s2 = inlined_call_operand.hbm [shape: s32[1,1], index: 2, kind: output, shape index: {1}]
  %3 = xla_tuple %s1, %s2
  %s4 = sld [smem:[#allocation0]]
  $region34: #{tpu_custom_call.1} parent=0
    _
  %s6 = ssub.s32 1, %s4
  %s7 = scalar_select 0, %s6, %s4
  $region1: #{tpu_custom_call.1} parent=0
    #allocation6 [shape = 'u8[12288]{0}', space=vmem, size = 0x3000, scoped, tag = 'input window, operand 0, single buffered']
    #allocation7 [shape = 's32[1]{0}', space=sflag, size = 0x4, scoped, tag = 'scoped memory for tpu_custom_call.1']
    #allocation8 [shape = 's32[1]{0}', space=sflag, size = 0x4, scoped, tag = 'scoped memory for tpu_custom_call.1']
    #allocation9 [shape = 'u8[512]{0}', space=smem, size = 0x200, scoped, tag = 'output window, operand 0, single buffered']
    #allocation10 [shape = 'u8[512]{0}', space=smem, size = 0x200, scoped, tag = 'output window, operand 1, single buffered']
    #allocation11 [shape = 's32[1]{0}', space=sflag, size = 0x4, scoped, tag = 'scoped memory for tpu_custom_call.1']
    %8 = vsyncpa [#allocation7], 0
    %9 = vsyncpa [#allocation8], 0
    %10 = vsyncpa [#allocation11], 0
    // Predicated region
    $region2: #{tpu_custom_call.1} parent=1 // pred_check
      _
    $region3: #{tpu_custom_call.1} parent=1 // pred_check_branch
      %12 = sbr.rel (0) target = $region5
    $region4: #{tpu_custom_call.1} parent=1 // pred_region
      %14 = vsyncadd [#allocation7], 0
      %s15 = sshll.u32 %s0, 4
      %s16 = int_to_ptr.hbm [resolvable:$true] %s15
      %s17 = sshll.u32 [#allocation6], 4
      %s18 = int_to_ptr.vmem [resolvable:$true] %s17
      %23 = dma.hbm_to_vmem [thread:$0]  %s16, 384, %s18, [#allocation7], 128, 128, 8
    $region5: #{tpu_custom_call.1} parent=1 // pred_fallthru
      _
    // Predicated region
    $region6: #{tpu_custom_call.1} parent=1 // pred_check
      _
    $region7: #{tpu_custom_call.1} parent=1 // pred_check_branch
      %25 = sbr.rel (0) target = $region9
    $region8: #{tpu_custom_call.1} parent=1 // pred_region
      %27 = dma.done [#allocation7], 384
    $region9: #{tpu_custom_call.1} parent=1 // pred_fallthru
      _
    %p28 = scmp.eq.s32.totalorder 0, 0
    // Predicated region
    $region10: #{tpu_custom_call.1} parent=1 // pred_check
      %p29 = pneg %p28
    $region11: #{tpu_custom_call.1} parent=1 // pred_check_branch
      %31 = sbr.rel (%p29) target = $region13
    $region12: #{tpu_custom_call.1} parent=1 // pred_region
      %vm32 = vcmask 195584
      %33 = vst.msk [vmem:[#allocation2] sm:$0xff] %vm32, 0.0
      %34 = vst.msk [vmem:[#allocation2 + $0x8] sm:$0xff] %vm32, 0.0
      %35 = vst.msk [vmem:[#allocation2 + $0x10] sm:$0xff] %vm32, 0.0
      %vm36 = vcmask 7168
      %37 = vst.msk [vmem:[#allocation3] sm:$0xff] %vm36, 0.0
      %38 = vst.msk [vmem:[#allocation3 + $0x8] sm:$0xff] %vm36, 0.0
      %39 = vst.msk [vmem:[#allocation3 + $0x10] sm:$0xff] %vm36, 0.0
      %40 = vst.msk [vmem:[#allocation4] sm:$0xff] %vm32, 0.0
      %vm41 = vcmask 46080
      %42 = vst.msk [vmem:[#allocation5] sm:$0x3f] %vm41, 0.0
    $region13: #{tpu_custom_call.1} parent=1 // pred_fallthru
      _
    %v43 = vld [vmem:[#allocation6] sm:$0xff]
    %v44 = vld [vmem:[#allocation6 + $0x8] sm:$0xff]
    %v45 = vld [vmem:[#allocation6 + $0x10] sm:$0xff]
    %v46 = vmul.f32 %v43, %v43
    %v47 = vmul.f32 %v44, %v44
    %v48 = vmul.f32 %v45, %v45
    %v49 = vld [vmem:[#allocation2] sm:$0xff]
    %v50 = vld [vmem:[#allocation2 + $0x8] sm:$0xff]
    %v51 = vld [vmem:[#allocation2 + $0x10] sm:$0xff]
    %vm52 = vcmask 261120
    %v54 = vsel %vm52, %v43, 0
    %v57 = vsel %vm52, %v44, 0
    %v60 = vsel %vm52, %v45, 0
    %62 = vmatpush.xpose.msra.mxu0 0.0
    %63 = vmatpush.xpose.msra.mxu0 0.0
    %64 = vmatpush.xpose.msra.mxu0 0.0
    %65 = vmatpush.xpose.msra.mxu0 0.0
    %66 = vmatpush.xpose.msra.mxu0 0.0
    %67 = vmatpush.xpose.msra.mxu0 0.0
    %68 = vmatpush.xpose.msra.mxu0 0.0
    %69 = vmatpush.xpose.msra.mxu0 0.0
    %70 = vmatpush.xpose.msra.mxu0 0.0
    %71 = vmatpush.xpose.msra.mxu0 0.0
    %72 = vmatpush.xpose.msra.mxu0 0.0
    %73 = vmatpush.xpose.msra.mxu0 0.0
    %74 = vmatpush.xpose.msra.mxu0 0.0
    %75 = vmatpush.xpose.msra.mxu0 %v60
    %76 = vmatpush.xpose.msra.mxu0 %v57
    %77 = vmatpush.xpose.msra.mxu0 %v54
    %78 = vmatmul.f32.gmra.mxu0 %v54
    %v79 = vpop.f32.mrf.mxu0
    %v80 = vadd.f32 0.0, %v79
    %81 = vmatmul.f32.gmra.mxu0 %v57
    %v82 = vpop.f32.mrf.mxu0
    %v83 = vadd.f32 0.0, %v82
    %84 = vmatmul.f32.gmra.mxu0 %v60
    %v85 = vpop.f32.mrf.mxu0
    %v86 = vadd.f32 0.0, %v85
    %87 = vdwg.mxu0
    %v88 = vadd.f32 %v49, %v80
    %v89 = vadd.f32 %v50, %v83
    %v90 = vadd.f32 %v51, %v86
    %vm91 = vcmask 195584
    %92 = vst.msk [vmem:[#allocation2] sm:$0xff] %vm91, %v88
    %93 = vst.msk [vmem:[#allocation2 + $0x8] sm:$0xff] %vm91, %v89
    %94 = vst.msk [vmem:[#allocation2 + $0x10] sm:$0xff] %vm91, %v90
    %v95 = vld [vmem:[#allocation3] sm:$0xff]
    %v96 = vld [vmem:[#allocation3 + $0x8] sm:$0xff]
    %v97 = vld [vmem:[#allocation3 + $0x10] sm:$0xff]
    %v98 = vsel %vm52, %v46, 0.0
    %99 = vadd.xlane.f32.xlu0 %v98
    %v100 = vpop.xlane.xlu0 %99
    %v101 = vsel %vm52, %v47, 0.0
    %102 = vadd.xlane.f32.xlu0 %v101
    %v103 = vpop.xlane.xlu0 %102
    %v104 = vsel %vm52, %v48, 0.0
    %105 = vadd.xlane.f32.xlu0 %v104
    %v106 = vpop.xlane.xlu0 %105
    %v107 = vadd.f32 %v95, %v100
    %v108 = vadd.f32 %v96, %v103
    %v109 = vadd.f32 %v97, %v106
    %vm110 = vcmask 7168
    %111 = vst.msk [vmem:[#allocation3] sm:$0xff] %vm110, %v107
    %112 = vst.msk [vmem:[#allocation3 + $0x8] sm:$0xff] %vm110, %v108
    %113 = vst.msk [vmem:[#allocation3 + $0x10] sm:$0xff] %vm110, %v109
    %v114 = vld [vmem:[#allocation4] sm:$0xff]
    %v116 = vsel %vm52, 1.0, 0
    %v119 = vsel %vm52, %v46, 0
    %v122 = vsel %vm52, %v47, 0
    %v125 = vsel %vm52, %v48, 0
    %127 = vmatpush.xpose.msra.mxu0 0.0
    %128 = vmatpush.xpose.msra.mxu0 0.0
    %129 = vmatpush.xpose.msra.mxu0 0.0
    %130 = vmatpush.xpose.msra.mxu0 0.0
    %131 = vmatpush.xpose.msra.mxu0 0.0
    %132 = vmatpush.xpose.msra.mxu0 0.0
    %133 = vmatpush.xpose.msra.mxu0 0.0
    %134 = vmatpush.xpose.msra.mxu0 0.0
    %135 = vmatpush.xpose.msra.mxu0 0.0
    %136 = vmatpush.xpose.msra.mxu0 0.0
    %137 = vmatpush.xpose.msra.mxu0 0.0
    %138 = vmatpush.xpose.msra.mxu0 0.0
    %139 = vmatpush.xpose.msra.mxu0 0.0
    %140 = vmatpush.xpose.msra.mxu0 %v125
    %141 = vmatpush.xpose.msra.mxu0 %v122
    %142 = vmatpush.xpose.msra.mxu0 %v119
    %143 = vmatmul.f32.gmra.mxu0 %v116
    %v144 = vpop.f32.mrf.mxu0
    %v145 = vadd.f32 0.0, %v144
    %146 = vdwg.mxu0
    %v147 = vadd.f32 %v114, %v145
    %148 = vst.msk [vmem:[#allocation4] sm:$0xff] %vm91, %v147
    %v149 = vlaneseq
    %v150 = vshrl.u32 %v149, 7
    %v151 = vlaneseq
    %v152 = vand.u32 %v151, 127
    %v153 = vmul.u32 %v150, 4
    %vm154 = vcmp.ge.s32.totalorder %v152, %v153
    %v155 = vadd.s32 %v150, 1
    %v156 = vmul.u32 %v155, 4
    %vm157 = vcmp.lt.s32.totalorder %v152, %v156
    %vm158 = vmand %vm154, %vm157
    %v159 = vsel %vm158, 1, 0
    %v160 = vcvt.s32.f32 %v159
    %v162 = vsel %vm91, %v160, 0
    %164 = vmatpush.msra.mxu0 0.0
    %165 = vmatpush.msra.mxu0 0.0
    %166 = vmatpush.msra.mxu0 0.0
    %167 = vmatpush.msra.mxu0 0.0
    %168 = vmatpush.msra.mxu0 0.0
    %169 = vmatpush.msra.mxu0 0.0
    %170 = vmatpush.msra.mxu0 0.0
    %171 = vmatpush.msra.mxu0 0.0
    %172 = vmatpush.msra.mxu0 0.0
    %173 = vmatpush.msra.mxu0 0.0
    %174 = vmatpush.msra.mxu0 0.0
    %175 = vmatpush.msra.mxu0 0.0
    %176 = vmatpush.msra.mxu0 0.0
    %177 = vmatpush.msra.mxu0 %v45
    %178 = vmatpush.msra.mxu0 %v44
    %179 = vmatpush.msra.mxu0 %v43
    %180 = vmatmul.f32.gmra.mxu0 %v162
    %v181 = vpop.f32.mrf.mxu0
    %v182 = vadd.f32 0.0, %v181
    %183 = vdwg.mxu0
    %v184 = vld [vmem:[#allocation5] sm:$0x3f]
    %v186 = vsel %vm52, %v182, 0
    %188 = vmatpush.xpose.msra.mxu0 0.0
    %189 = vmatpush.xpose.msra.mxu0 0.0
    %190 = vmatpush.xpose.msra.mxu0 0.0
    %191 = vmatpush.xpose.msra.mxu0 0.0
    %192 = vmatpush.xpose.msra.mxu0 0.0
    %193 = vmatpush.xpose.msra.mxu0 0.0
    %194 = vmatpush.xpose.msra.mxu0 0.0
    %195 = vmatpush.xpose.msra.mxu0 0.0
    %196 = vmatpush.xpose.msra.mxu0 0.0
    %197 = vmatpush.xpose.msra.mxu0 0.0
    %198 = vmatpush.xpose.msra.mxu0 0.0
    %199 = vmatpush.xpose.msra.mxu0 0.0
    %200 = vmatpush.xpose.msra.mxu0 0.0
    %201 = vmatpush.xpose.msra.mxu0 0.0
    %202 = vmatpush.xpose.msra.mxu0 0.0
    %203 = vmatpush.xpose.msra.mxu0 %v186
    %204 = vmatmul.f32.gmra.mxu0 %v186
    %v205 = vpop.f32.mrf.mxu0
    %v206 = vadd.f32 0.0, %v205
    %207 = vdwg.mxu0
    %v208 = vadd.f32 %v184, %v206
    %vm209 = vcmask 46080
    %210 = vst.msk [vmem:[#allocation5] sm:$0x3f] %vm209, %v208
    // Predicated region
    $region14: #{tpu_custom_call.1} parent=1 // pred_check
      %p211 = pneg %p28
    $region15: #{tpu_custom_call.1} parent=1 // pred_check_branch
      %213 = sbr.rel (%p211) target = $region17
    $region16: #{tpu_custom_call.1} parent=1 // pred_region
      %v214 = vld [vmem:[#allocation3] sm:$0xff]
      %v215 = vld [vmem:[#allocation3 + $0x8] sm:$0xff]
      %v216 = vld [vmem:[#allocation3 + $0x10] sm:$0xff]
      %v217 = vld [vmem:[#allocation4] sm:$0x1]
      %219 = vset.pattern.permute.xlu0 0
      %220 = vperm.xlu0 %219, %v214
      %v221 = vpop.permute.xlu0 %220
      %224 = vset.pattern.permute.xlu0 0
      %225 = vperm.xlu0 %224, %v215
      %v226 = vpop.permute.xlu0 %225
      %229 = vset.pattern.permute.xlu0 0
      %230 = vperm.xlu0 %229, %v216
      %v231 = vpop.permute.xlu0 %230
      %v233 = vperm.slane %v217, 0
      %v234 = vadd.f32 %v221, %v233
      %v235 = vadd.f32 %v226, %v233
      %v236 = vadd.f32 %v231, %v233
      %v237 = vld [vmem:[#allocation2] sm:$0xff]
      %v238 = vld [vmem:[#allocation2 + $0x8] sm:$0xff]
      %v239 = vld [vmem:[#allocation2 + $0x10] sm:$0xff]
      %v240 = vmul.f32 %v237, 2.0
      %v241 = vmul.f32 %v238, 2.0
      %v242 = vmul.f32 %v239, 2.0
      %v243 = vsub.f32 %v234, %v240
      %v244 = vsub.f32 %v235, %v241
      %v245 = vsub.f32 %v236, %v242
      %v246 = vmax.f32 %v243, 1e-12
      %v247 = vmax.f32 %v244, 1e-12
      %v248 = vmax.f32 %v245, 1e-12
      %v249 = vrsqrt.pop %v246
      %v250 = vmul.f32 %v249, %v246
      %v251 = vmul.f32 %v250, %v249
      %v252 = vmul.f32 0.5, %v251
      %v253 = vsub.f32 1.5, %v252
      %v254 = vmul.f32 %v249, %v253
      %v255 = vmul.f32 %v246, %v254
      %vm256 = vcmp.eq.f32.partialorder %v246, inf
      %v257 = vsel %vm256, %v246, %v255
      %vm258 = vcmp.eq.f32.partialorder %v246, 0.0
      %v259 = vand.u32 %v246, 2147483648
      %v260 = vsel %vm258, %v259, %v257
      %v261 = vrsqrt.pop %v247
      %v262 = vmul.f32 %v261, %v247
      %v263 = vmul.f32 %v262, %v261
      %v264 = vmul.f32 0.5, %v263
      %v265 = vsub.f32 1.5, %v264
      %v266 = vmul.f32 %v261, %v265
      %v267 = vmul.f32 %v247, %v266
      %vm268 = vcmp.eq.f32.partialorder %v247, inf
      %v269 = vsel %vm268, %v247, %v267
      %vm270 = vcmp.eq.f32.partialorder %v247, 0.0
      %v271 = vand.u32 %v247, 2147483648
      %v272 = vsel %vm270, %v271, %v269
      %v273 = vrsqrt.pop %v248
      %v274 = vmul.f32 %v273, %v248
      %v275 = vmul.f32 %v274, %v273
      %v276 = vmul.f32 0.5, %v275
      %v277 = vsub.f32 1.5, %v276
      %v278 = vmul.f32 %v273, %v277
      %v279 = vmul.f32 %v248, %v278
      %vm280 = vcmp.eq.f32.partialorder %v248, inf
      %v281 = vsel %vm280, %v248, %v279
      %vm282 = vcmp.eq.f32.partialorder %v248, 0.0
      %v283 = vand.u32 %v248, 2147483648
      %v284 = vsel %vm282, %v283, %v281
      %285 = vst.msk [vmem:[#allocation2] sm:$0xff] %vm91, %v260
      %286 = vst.msk [vmem:[#allocation2 + $0x8] sm:$0xff] %vm91, %v272
      %287 = vst.msk [vmem:[#allocation2 + $0x10] sm:$0xff] %vm91, %v284
      %v288 = vld [vmem:[#allocation2] sm:$0xff]
      %v289 = vld [vmem:[#allocation2 + $0x8] sm:$0xff]
      %v290 = vld [vmem:[#allocation2 + $0x10] sm:$0xff]
      %v291 = vadd.s32 %v150, 8
      %v292 = vadd.s32 %v150, 16
      %vm293 = vcmp.ge.s32.totalorder %v150, 4
      %vm294 = vcmp.ge.s32.totalorder %v291, 4
      %vm295 = vcmp.ge.s32.totalorder %v292, 4
      %v296 = vsel %vm293, 1, 0
      %v297 = vsel %vm294, 1, 0
      %v298 = vsel %vm295, 1, 0
      %vm299 = vcmp.ge.s32.totalorder %v152, 4
      %v300 = vsel %vm299, 1, 0
      %vm301 = vcmp.ge.s32.totalorder %v150, 8
      %vm302 = vcmp.ge.s32.totalorder %v291, 8
      %vm303 = vcmp.ge.s32.totalorder %v292, 8
      %v304 = vsel %vm301, 1, 0
      %v305 = vsel %vm302, 1, 0
      %v306 = vsel %vm303, 1, 0
      %v307 = vadd.s32 %v296, %v304
      %v308 = vadd.s32 %v297, %v305
      %v309 = vadd.s32 %v298, %v306
      %vm310 = vcmp.ge.s32.totalorder %v152, 8
      %v311 = vsel %vm310, 1, 0
      %v312 = vadd.s32 %v300, %v311
      %vm313 = vcmp.ge.s32.totalorder %v150, 12
      %vm314 = vcmp.ge.s32.totalorder %v291, 12
      %vm315 = vcmp.ge.s32.totalorder %v292, 12
      %v316 = vsel %vm313, 1, 0
      %v317 = vsel %vm314, 1, 0
      %v318 = vsel %vm315, 1, 0
      %v319 = vadd.s32 %v307, %v316
      %v320 = vadd.s32 %v308, %v317
      %v321 = vadd.s32 %v309, %v318
      %vm322 = vcmp.ge.s32.totalorder %v152, 12
      %v323 = vsel %vm322, 1, 0
      %v324 = vadd.s32 %v312, %v323
      %vm325 = vcmp.ge.s32.totalorder %v150, 16
      %vm326 = vcmp.ge.s32.totalorder %v291, 16
      %vm327 = vcmp.ge.s32.totalorder %v292, 16
      %v328 = vsel %vm325, 1, 0
      %v329 = vsel %vm326, 1, 0
      %v330 = vsel %vm327, 1, 0
      %v331 = vadd.s32 %v319, %v328
      %v332 = vadd.s32 %v320, %v329
      %v333 = vadd.s32 %v321, %v330
      %vm334 = vcmp.ge.s32.totalorder %v152, 16
      %v335 = vsel %vm334, 1, 0
      %v336 = vadd.s32 %v324, %v335
      %vm337 = vcmp.ge.s32.totalorder %v150, 20
      %vm338 = vcmp.ge.s32.totalorder %v291, 20
      %vm339 = vcmp.ge.s32.totalorder %v292, 20
      %v340 = vsel %vm337, 1, 0
      %v341 = vsel %vm338, 1, 0
      %v342 = vsel %vm339, 1, 0
      %v343 = vadd.s32 %v331, %v340
      %v344 = vadd.s32 %v332, %v341
      %v345 = vadd.s32 %v333, %v342
      %vm346 = vcmp.ge.s32.totalorder %v152, 20
      %v347 = vsel %vm346, 1, 0
      %v348 = vadd.s32 %v336, %v347
      %vm349 = vcmp.eq.s32.totalorder %v343, %v348
      %vm350 = vcmp.eq.s32.totalorder %v344, %v348
      %vm351 = vcmp.eq.s32.totalorder %v345, %v348
      %v352 = vsel %vm349, %v288, -1e+30
      %v353 = vsel %vm350, %v289, -1e+30
      %v354 = vsel %vm351, %v290, -1e+30
      %v355 = vsel %vm91, %v352, -inf
      %v356 = vsel %vm91, %v353, -inf
      %v357 = vsel %vm91, %v354, -inf
      %v358 = vmax.f32 %v355, %v356
      %v359 = vmax.f32 %v358, %v357
      %v360 = vrot.slane %v359, 4
      %v361 = vmax.f32 %v359, %v360
      %v362 = vrot.slane %v361, 2
      %v363 = vmax.f32 %v361, %v362
      %v364 = vrot.slane %v363, 1
      %v365 = vmax.f32 %v363, %v364
      %v366 = vsub.f32 %v352, %v365
      %v367 = vsub.f32 %v353, %v365
      %v368 = vsub.f32 %v354, %v365
      %v369 = vmul.f32 %v366, 1.442695
      %v370 = vpow.pop %v369
      %v371 = vmul.f32 %v367, 1.442695
      %v372 = vpow.pop %v371
      %v373 = vmul.f32 %v368, 1.442695
      %v374 = vpow.pop %v373
      %v375 = vsel %vm91, %v370, 0.0
      %v376 = vsel %vm91, %v372, 0.0
      %v377 = vadd.f32 %v375, %v376
      %v378 = vsel %vm91, %v374, 0.0
      %v379 = vadd.f32 %v377, %v378
      %380 = vadd.xlane.f32.xlu0 %v379
      %v381 = vpop.xlane.xlu0 %380
      %v382 = vrot.slane %v381, 4
      %v383 = vadd.f32 %v381, %v382
      %v384 = vrot.slane %v383, 2
      %v385 = vadd.f32 %v383, %v384
      %v386 = vrot.slane %v385, 1
      %v387 = vadd.f32 %v385, %v386
      %s388 = vtos %v387
      %s389 = smul.f32 %s388, 0.010416667
      %v390 = vld [vmem:[#allocation5] sm:$0x3f]
      %v391 = vmul.f32 %v390, 0.0625
      %vm392 = vcmp.eq.s32.totalorder %v150, %v152
      %v393 = vsel %vm392, %v391, 0.0
      %v394 = vsel %vm209, %v393, 0.0
      %395 = vadd.xlane.f32.xlu0 %v394
      %v396 = vpop.xlane.xlu0 %395
      %v397 = vrot.slane %v394, 4
      %v398 = vadd.f32 %v394, %v397
      %v399 = vrot.slane %v398, 2
      %v400 = vadd.f32 %v398, %v399
      %v401 = vrot.slane %v400, 1
      %v402 = vadd.f32 %v400, %v401
      %v403 = vadd.f32 %v396, %v402
      %v404 = vmul.f32 %v391, 2.0
      %v405 = vsub.f32 %v403, %v404
      %v406 = vmax.f32 %v405, 1e-12
      %v407 = vrsqrt.pop %v406
      %v408 = vmul.f32 %v407, %v406
      %v409 = vmul.f32 %v408, %v407
      %v410 = vmul.f32 0.5, %v409
      %v411 = vsub.f32 1.5, %v410
      %v412 = vmul.f32 %v407, %v411
      %v413 = vmul.f32 %v406, %v412
      %vm414 = vcmp.eq.f32.partialorder %v406, inf
      %v415 = vsel %vm414, %v406, %v413
      %vm416 = vcmp.eq.f32.partialorder %v406, 0.0
      %v417 = vand.u32 %v406, 2147483648
      %v418 = vsel %vm416, %v417, %v415
      %v419 = vsub.s32 %v150, %v152
      %vm420 = vcmp.eq.s32.totalorder %v419, 0
      %vm421 = vcmp.eq.s32.totalorder %v419, 2
      %vm422 = vmor %vm420, %vm421
      %vm423 = vcmp.eq.s32.totalorder %v419, 4294967294
      %vm424 = vmor %vm422, %vm423
      %vm425 = vcmp.eq.s32.totalorder %v419, 4
      %vm426 = vmor %vm424, %vm425
      %vm427 = vcmp.eq.s32.totalorder %v419, 4294967292
      %vm428 = vmor %vm426, %vm427
      %v429 = vsel %vm428, %v418, -1e+30
      %v430 = vsel %vm209, %v429, -inf
      %431 = vmax.xlane.f32.xlu0 %v430
      %v432 = vpop.xlane.xlu0 %431
      %v433 = vsel %vm428, 1e+30, %v418
      %v434 = vsel %vm209, %v433, inf
      %435 = vmin.xlane.f32.xlu0 %v434
      %v436 = vpop.xlane.xlu0 %435
      %v437 = vsub.f32 %v432, %v436
      %v438 = vadd.f32 %v437, 0.3
      %v439 = vmax.f32 %v438, 0.0
      %vm440 = vcmask 5120
      %v441 = vsel %vm440, %v439, 0.0
      %442 = vadd.xlane.f32.xlu0 %v441
      %v443 = vpop.xlane.xlu0 %442
      %v444 = vrot.slane %v443, 4
      %v445 = vadd.f32 %v443, %v444
      %v446 = vrot.slane %v445, 2
      %v447 = vadd.f32 %v445, %v446
      %v448 = vrot.slane %v447, 1
      %v449 = vadd.f32 %v447, %v448
      %s450 = vtos %v449
      %s451 = smul.f32 %s450, 0.16666667
      %s452 = smul.f32 %s389, 0.1
      %s453 = sadd.f32 %s451, %s452
      %s454 = scalar_lea.smem [#allocation9], 0
      %455 = sst [smem:[%s454]] %s453
      %vm456 = vcmp.ge.f32.partialorder %v436, %v432
      %v457 = vsel %vm456, 1, 0
      %vm458 = vcmask 1045504
      %v459 = vsel %vm458, %v457, 0
      %v460 = vrot.slane %v459, 4
      %v461 = vadd.s32 %v459, %v460
      %v462 = vrot.slane %v461, 2
      %v463 = vadd.s32 %v461, %v462
      %v464 = vrot.slane %v463, 1
      %v465 = vadd.s32 %v463, %v464
      %s466 = vtos %v465
      %s467 = scalar_lea.smem [#allocation10], 0
      %468 = sst [smem:[%s467]] %s466
    $region17: #{tpu_custom_call.1} parent=1 // pred_fallthru
      _
    // Predicated region
    $region18: #{tpu_custom_call.1} parent=1 // pred_check
      _
    $region19: #{tpu_custom_call.1} parent=1 // pred_check_branch
      %470 = sbr.rel (0) target = $region21
    $region20: #{tpu_custom_call.1} parent=1 // pred_region
      %472 = vsyncadd [#allocation8], 0
      %s474 = sshll.u32 %s1, 4
      %s475 = int_to_ptr.hbm [resolvable:$true] %s474
      %477 = dma.smem_to_hbm [#allocation9], 16, %s475, [#allocation8]
    $region21: #{tpu_custom_call.1} parent=1 // pred_fallthru
      _
    // Predicated region
    $region22: #{tpu_custom_call.1} parent=1 // pred_check
      _
    $region23: #{tpu_custom_call.1} parent=1 // pred_check_branch
      %479 = sbr.rel (0) target = $region25
    $region24: #{tpu_custom_call.1} parent=1 // pred_region
      %481 = vsyncadd [#allocation11], 0
      %s483 = sshll.u32 %s2, 4
      %s484 = int_to_ptr.hbm [resolvable:$true] %s483
      %486 = dma.smem_to_hbm [#allocation10], 16, %s484, [#allocation11]
    $region25: #{tpu_custom_call.1} parent=1 // pred_fallthru
      _
    // Predicated region
    $region26: #{tpu_custom_call.1} parent=1 // pred_check
      _
    $region27: #{tpu_custom_call.1} parent=1 // pred_check_branch
      %488 = sbr.rel (0) target = $region29
    $region28: #{tpu_custom_call.1} parent=1 // pred_region
      %490 = dma.done [#allocation8], 16
    $region29: #{tpu_custom_call.1} parent=1 // pred_fallthru
      _
    // Predicated region
    $region30: #{tpu_custom_call.1} parent=1 // pred_check
      _
    $region31: #{tpu_custom_call.1} parent=1 // pred_check_branch
      %492 = sbr.rel (0) target = $region33
    $region32: #{tpu_custom_call.1} parent=1 // pred_region
      %494 = dma.done [#allocation11], 16
    $region33: #{tpu_custom_call.1} parent=1 // pred_fallthru
      _
    %495 = sfence
    %496 = vsyncpa [#allocation7], 1
    %497 = vsyncpa [#allocation8], 1
    %498 = vsyncpa [#allocation11], 1

</llo_original>
